<compile_context>
chip_gen: v6e
topology: v6e:2x2x1
jax: 0.10.0
libtpu: 0.0.40
codegen_flags: <defaults>
</compile_context>

<pallas_src>
import functools

import jax
import jax.numpy as jnp
from jax.experimental import pallas as pl
from jax.experimental.pallas import tpu as pltpu


def _round_up(a: int, m: int) -> int:
    return (a + m - 1) // m * m


def _cdiv(a: int, b: int) -> int:
    return (a + b - 1) // b


def _rbf_kernel(x_ref, ct2_ref, consts_ref, w_ref, o_ref):
    # x_ref      : [TN, F]  f32   tile of flattened input rows
    # ct2_ref    : [F,  Kp] bf16  (2 * centers)^T, zero cols for k >= K
    # consts_ref : [2,  Kp] f32   row 0: -exp(2*log_shapes) (pad: 0)
    #                             row 1: -eps2 * ||c||^2     (pad: -1e30 -> rbf 0)
    # w_ref      : [Kp, O]  bf16  weights^T, zero rows for k >= K
    # o_ref      : [TN, O]  f32
    x = x_ref[...]

    # Split-precision bf16 distance matmul: centers are bf16 in the module, so
    # the c side is exact; x_hi + x_lo recovers ~f32 precision on the x side at
    # ~2 bf16 MXU passes instead of a multi-pass f32 matmul.
    x_hi = x.astype(jnp.bfloat16)
    x_lo = (x - x_hi.astype(jnp.float32)).astype(jnp.bfloat16)
    ct2 = ct2_ref[...]
    xc2 = jnp.dot(x_hi, ct2, preferred_element_type=jnp.float32)      # 2 * x.c
    xc2 = xc2 + jnp.dot(x_lo, ct2, preferred_element_type=jnp.float32)

    x_sq = jnp.sum(x * x, axis=-1, keepdims=True)                     # [TN, 1]

    neg_eps2 = consts_ref[0:1, :]                                     # [1, Kp]
    bias_e = consts_ref[1:2, :]                                       # [1, Kp]

    # arg = -eps2 * ||x - c||^2 = -eps2 * (||x||^2 - 2 x.c) - eps2 * ||c||^2
    arg = neg_eps2 * (x_sq - xc2) + bias_e                            # [TN, Kp]
    arg = jnp.minimum(arg, 0.0)        # guard tiny negative r2 from rounding
    rbfs = jnp.exp(arg)                # f32 on the EUP
    # TODO(synk): on v6e/v7x a bf16 exp halves EUP time but adds ~|arg|*2^-8
    # relative error; kept f32 for accuracy (and required on v5e).

    # Normalization denominator in f32 (XLU cross-lane reduce, nearly free
    # slot); padded columns contribute exactly 0.
    denom = jnp.sum(rbfs, axis=-1, keepdims=True)                     # [TN, 1]

    # Output projection: bf16 x bf16 on the MXU with f32 accumulate.
    proj = jnp.dot(rbfs.astype(jnp.bfloat16), w_ref[...],
                   preferred_element_type=jnp.float32)                # [TN, O]

    o_ref[...] = proj * pl.reciprocal(denom + 1e-9, approx=True)


@functools.partial(jax.jit, static_argnames=("tile_n",))
def rbf_layer_forward(x, centers, log_shapes, weights, *, tile_n=256):
    """x: [B, S, F] f32; centers: [K, F] bf16; log_shapes: [K] bf16;
    weights: [O, K] bf16  ->  [B, S, O] f32."""
    B, S, F = x.shape
    K = centers.shape[0]
    O = weights.shape[0]
    N = B * S

    Kp = _round_up(K, 128)            # lane-dense kernel axis

    # Row tile: default 256 (sweep 512/1024 for very large N).  Ensure at
    # least 2 grid steps when possible so the parallel N axis can shard across
    # both TensorCores on v7x.
    tn = min(tile_n, _round_up(N, 8))
    if N > 8 and _cdiv(N, tn) < 2:
        tn = _round_up(_cdiv(N, 2), 8)
    Np = _round_up(N, tn)

    x2 = x.reshape(N, F).astype(jnp.float32)
    if Np != N:
        # TODO(synk): handle the ragged last tile in-kernel (masked store)
        # instead of padding + row-slicing, to avoid the extra HBM pass.
        x2 = jnp.pad(x2, ((0, Np - N), (0, 0)))

    # ----- grid-invariant parameter glue (hoisted, pre-transposed) -----
    c_f32 = centers.astype(jnp.float32)                               # [K, F]
    c_sq = jnp.sum(c_f32 * c_f32, axis=-1)                            # [K]
    eps2 = jnp.exp(2.0 * log_shapes.astype(jnp.float32))              # [K]

    # (2 * centers)^T in bf16 (exact: exponent bump of bf16 data); contraction
    # is over RHS dim 0 -> no per-step relayout in the kernel.
    ct2 = jnp.pad(2.0 * c_f32.T, ((0, 0), (0, Kp - K))).astype(jnp.bfloat16)

    neg_eps2 = jnp.pad(-eps2, (0, Kp - K))                            # pad: 0
    bias_e = jnp.pad(-eps2 * c_sq, (0, Kp - K), constant_values=-1e30)
    consts = jnp.stack([neg_eps2, bias_e], axis=0)                    # [2, Kp]

    w_t = jnp.pad(weights.astype(jnp.bfloat16).T,
                  ((0, Kp - K), (0, 0)))                              # [Kp, O]

    # Explicit VMEM budget: every block is double-buffered by default, plus
    # slack for the [tn, Kp] f32 intermediates.
    # TODO(synk): pipeline_mode=pl.Buffered(1) on the constant blocks and a
    # K-tiled accumulator grid for very large K*F (v7x: 64 MiB physical VMEM).
    footprint = 2 * (tn * F * 4 + F * Kp * 2 + 2 * Kp * 4 + Kp * O * 2
                     + tn * O * 4) + 4 * tn * Kp * 4
    vmem_limit = min(max(footprint + (4 << 20), 16 << 20), 64 << 20)

    out = pl.pallas_call(
        _rbf_kernel,
        out_shape=jax.ShapeDtypeStruct((Np, O), jnp.float32),
        grid_spec=pltpu.PrefetchScalarGridSpec(
            num_scalar_prefetch=0,
            grid=(Np // tn,),
            in_specs=[
                pl.BlockSpec((tn, F), lambda i: (i, 0)),   # x rows (streamed)
                pl.BlockSpec((F, Kp), lambda i: (0, 0)),   # (2*centers)^T
                pl.BlockSpec((2, Kp), lambda i: (0, 0)),   # [-eps2; -eps2*||c||^2]
                pl.BlockSpec((Kp, O), lambda i: (0, 0)),   # weights^T
            ],
            out_specs=pl.BlockSpec((tn, O), lambda i: (i, 0)),
        ),
        compiler_params=pltpu.CompilerParams(
            dimension_semantics=("parallel",),
            vmem_limit_bytes=vmem_limit),
    )(x2, ct2, consts, w_t)

    if Np != N:
        out = out[:N]
    return out.reshape(B, S, O)


def rbf_reference(x, centers, log_shapes, weights):
    """Pure-JAX transcription of RBFLayer.forward (for verification)."""
    xf = x.astype(jnp.float32)
    c = centers.astype(jnp.float32)
    diff = xf[:, :, None, :] - c[None, None, :, :]                    # [B,S,K,F]
    r = jnp.sqrt(jnp.sum(diff * diff, axis=-1))                       # [B,S,K]
    eps = jnp.exp(log_shapes.astype(jnp.float32))[None, None, :]
    rbfs = jnp.exp(-((eps * r) ** 2))
    rbfs = rbfs / (1e-9 + jnp.sum(rbfs, axis=-1, keepdims=True))
    return jnp.einsum("bsk,ok->bso", rbfs, weights.astype(jnp.float32))


def init_params(key, in_features, num_kernels, out_features):
    """Deterministic parameter init matching RBFLayer.reset()."""
    k_c, k_s, k_w = jax.random.split(key, 3)
    centers = jax.random.uniform(
        k_c, (num_kernels, in_features), jnp.float32,
        minval=-1.0, maxval=1.0).astype(jnp.bfloat16)
    log_shapes = (0.1 * jax.random.normal(
        k_s, (num_kernels,), jnp.float32)).astype(jnp.bfloat16)
    # xavier_uniform for weights [out_features, num_kernels]
    limit = (6.0 / (num_kernels + out_features)) ** 0.5
    weights = jax.random.uniform(
        k_w, (out_features, num_kernels), jnp.float32,
        minval=-limit, maxval=limit).astype(jnp.bfloat16)
    return centers, log_shapes, weights
    # TODO(synk): radial_function / norm_function are arbitrary Callables in
    # the PyTorch module; Gaussian / L2 are hard-coded here.


if __name__ == "__main__":
    B, S, F = 2, 8, 32          # batch, sequence, in_features
    K, O = 8, 16                # num_kernels, out_features

    key = jax.random.PRNGKey(0)
    k_x, k_p = jax.random.split(key)
    x = 0.3 * jax.random.normal(k_x, (B, S, F), jnp.float32)
    centers, log_shapes, weights = init_params(k_p, F, K, O)

    out = rbf_layer_forward(x, centers, log_shapes, weights)
    out = jax.block_until_ready(out)

    ref = rbf_reference(x, centers, log_shapes, weights)
    assert out.shape == (B, S, O) and out.dtype == jnp.float32
    # Tolerance budget: bf16 rounding of the rbfs feeding the MXU projection
    # (~2^-9 relative on values in [0,1]) plus the EUP approximate reciprocal
    # (~2^-14); denominator is exact f32.
    assert jnp.allclose(out, ref, rtol=5e-3, atol=5e-3), (
        float(jnp.max(jnp.abs(out - ref))))

    print("KERNEL_OK")
</pallas_src>

<mosaic_0001>
module attributes {stable_mosaic.version = 11 : i64} {
  func.func @_rbf_kernel(%arg0: i32, %arg1: memref<8x32xf32, #tpu.memory_space<vmem>>, %arg2: memref<32x128xbf16, #tpu.memory_space<vmem>>, %arg3: memref<2x128xf32, #tpu.memory_space<vmem>>, %arg4: memref<128x16xbf16, #tpu.memory_space<vmem>>, %arg5: memref<8x16xf32, #tpu.memory_space<vmem>>) attributes {dimension_semantics = [#tpu.dimension_semantics<parallel>], iteration_bounds = array<i64: 2>, scalar_prefetch = 0 : i64, scratch_operands = 0 : i64, tpu.core_type = #tpu.core_type<tc>, window_params = [{transform_indices = @transform_0, window_bounds = array<i64: 8, 32>}, {pipeline_mode = #tpu.pipeline_mode<synchronous>, transform_indices = @transform_1, window_bounds = array<i64: 32, 128>}, {pipeline_mode = #tpu.pipeline_mode<synchronous>, transform_indices = @transform_2, window_bounds = array<i64: 2, 128>}, {pipeline_mode = #tpu.pipeline_mode<synchronous>, transform_indices = @transform_3, window_bounds = array<i64: 128, 16>}, {transform_indices = @transform_4, window_bounds = array<i64: 8, 16>}]} {
    %c0 = arith.constant 0 : index
    %c0_0 = arith.constant 0 : index
    %0 = vector.load %arg1[%c0, %c0_0] : memref<8x32xf32, #tpu.memory_space<vmem>>, vector<8x32xf32>
    %1 = arith.truncf %0 : vector<8x32xf32> to vector<8x32xbf16>
    %2 = arith.extf %1 : vector<8x32xbf16> to vector<8x32xf32>
    %3 = arith.subf %0, %2 : vector<8x32xf32>
    %4 = arith.truncf %3 : vector<8x32xf32> to vector<8x32xbf16>
    %c0_1 = arith.constant 0 : index
    %c0_2 = arith.constant 0 : index
    %5 = vector.load %arg2[%c0_1, %c0_2] : memref<32x128xbf16, #tpu.memory_space<vmem>>, vector<32x128xbf16>
    %cst = arith.constant dense<0.000000e+00> : vector<8x128xf32>
    %6 = tpu.matmul %1, %5, %cst {dimension_numbers = #tpu.dot_dimension_numbers<[1], [0], [0], [1], [0, 0, 1, 1], [], []>} : vector<8x32xbf16>, vector<32x128xbf16>, vector<8x128xf32> -> vector<8x128xf32>
    %cst_3 = arith.constant dense<0.000000e+00> : vector<8x128xf32>
    %7 = tpu.matmul %4, %5, %cst_3 {dimension_numbers = #tpu.dot_dimension_numbers<[1], [0], [0], [1], [0, 0, 1, 1], [], []>} : vector<8x32xbf16>, vector<32x128xbf16>, vector<8x128xf32> -> vector<8x128xf32>
    %8 = arith.addf %6, %7 : vector<8x128xf32>
    %9 = arith.mulf %0, %0 : vector<8x32xf32>
    %cst_4 = arith.constant dense<0.000000e+00> : vector<8xf32>
    %10 = vector.multi_reduction <add>, %9, %cst_4 [1] : vector<8x32xf32> to vector<8xf32>
    %11 = vector.shape_cast %10 : vector<8xf32> to vector<8x1xf32>
    %c0_5 = arith.constant 0 : index
    %c0_6 = arith.constant 0 : index
    %12 = vector.load %arg3[%c0_5, %c0_6] : memref<2x128xf32, #tpu.memory_space<vmem>>, vector<1x128xf32>
    %c1 = arith.constant 1 : index
    %c0_7 = arith.constant 0 : index
    %13 = vector.load %arg3[%c1, %c0_7] : memref<2x128xf32, #tpu.memory_space<vmem>>, vector<1x128xf32>
    %14 = vector.broadcast %11 : vector<8x1xf32> to vector<8x128xf32>
    %15 = arith.subf %14, %8 : vector<8x128xf32>
    %16 = vector.broadcast %12 : vector<1x128xf32> to vector<8x128xf32>
    %17 = arith.mulf %16, %15 : vector<8x128xf32>
    %18 = vector.broadcast %13 : vector<1x128xf32> to vector<8x128xf32>
    %19 = arith.addf %17, %18 : vector<8x128xf32>
    %cst_8 = arith.constant 0.000000e+00 : f32
    %20 = vector.broadcast %cst_8 : f32 to vector<8x128xf32>
    %21 = arith.minimumf %19, %20 : vector<8x128xf32>
    %22 = math.exp %21 : vector<8x128xf32>
    %cst_9 = arith.constant dense<0.000000e+00> : vector<8xf32>
    %23 = vector.multi_reduction <add>, %22, %cst_9 [1] : vector<8x128xf32> to vector<8xf32>
    %24 = vector.shape_cast %23 : vector<8xf32> to vector<8x1xf32>
    %25 = arith.truncf %22 : vector<8x128xf32> to vector<8x128xbf16>
    %c0_10 = arith.constant 0 : index
    %c0_11 = arith.constant 0 : index
    %26 = vector.load %arg4[%c0_10, %c0_11] : memref<128x16xbf16, #tpu.memory_space<vmem>>, vector<128x16xbf16>
    %cst_12 = arith.constant dense<0.000000e+00> : vector<8x16xf32>
    %27 = tpu.matmul %25, %26, %cst_12 {dimension_numbers = #tpu.dot_dimension_numbers<[1], [0], [0], [1], [0, 0, 1, 1], [], []>} : vector<8x128xbf16>, vector<128x16xbf16>, vector<8x16xf32> -> vector<8x16xf32>
    %cst_13 = arith.constant 9.99999971E-10 : f32
    %28 = vector.broadcast %cst_13 : f32 to vector<8x1xf32>
    %29 = arith.addf %24, %28 : vector<8x1xf32>
    %30 = tpu.reciprocal %29 {approx = true} : vector<8x1xf32> -> vector<8x1xf32>
    %31 = vector.broadcast %30 : vector<8x1xf32> to vector<8x16xf32>
    %32 = arith.mulf %27, %31 : vector<8x16xf32>
    %c0_14 = arith.constant 0 : index
    %c0_15 = arith.constant 0 : index
    %33 = vector.load %arg5[%c0_14, %c0_15] : memref<8x16xf32, #tpu.memory_space<vmem>>, vector<8x16xf32>
    tpu.vector_store %arg5[%c0_14, %c0_15], %32 {strides = array<i32>} : memref<8x16xf32, #tpu.memory_space<vmem>>, vector<8x16xf32>,
    return
  }
  func.func @transform_0(%arg0: i32) -> (i32, i32) {
    %c0_i32 = arith.constant 0 : i32
    %c0_i32_0 = arith.constant 0 : i32
    return %arg0, %c0_i32 : i32, i32
  }
  func.func @transform_1(%arg0: i32) -> (i32, i32) {
    %c0_i32 = arith.constant 0 : i32
    %c0_i32_0 = arith.constant 0 : i32
    %c0_i32_1 = arith.constant 0 : i32
    return %c0_i32, %c0_i32_0 : i32, i32
  }
  func.func @transform_2(%arg0: i32) -> (i32, i32) {
    %c0_i32 = arith.constant 0 : i32
    %c0_i32_0 = arith.constant 0 : i32
    %c0_i32_1 = arith.constant 0 : i32
    return %c0_i32, %c0_i32_0 : i32, i32
  }
  func.func @transform_3(%arg0: i32) -> (i32, i32) {
    %c0_i32 = arith.constant 0 : i32
    %c0_i32_0 = arith.constant 0 : i32
    %c0_i32_1 = arith.constant 0 : i32
    return %c0_i32, %c0_i32_0 : i32, i32
  }
  func.func @transform_4(%arg0: i32) -> (i32, i32) {
    %c0_i32 = arith.constant 0 : i32
    %c0_i32_0 = arith.constant 0 : i32
    return %arg0, %c0_i32 : i32, i32
  }
}

</mosaic_0001>

<llo_original>
// kernel: rbf_layer_forward.1
$region0: #{rbf_layer_forward.1}
  #allocation0 [shape = 'u32[]', space=smem, size = 0x4, offset = 0x4, fixed_abs, tag = 'smem constant byte address 0x4 - core index']
  #allocation1 [shape = 'u32[144,128]{1,0:T(1,128)}', space=vmem, size = 0x12000, scoped, tag = 'internal scratch']
  %s0 = inlined_call_operand.vmem [shape: f32[16,32], index: 0, kind: input, shape index: {}]
  %s1 = inlined_call_operand.vmem [shape: bf16[32,128], index: 1, kind: input, shape index: {}]
  %s2 = inlined_call_operand.vmem [shape: f32[2,128], index: 2, kind: input, shape index: {}]
  %s3 = inlined_call_operand.vmem [shape: bf16[128,16], index: 3, kind: input, shape index: {}]
  %s4 = inlined_call_operand.hbm [shape: f32[16,16], index: 4, kind: output, shape index: {}]
  %s5 = sld [smem:[#allocation0]]
  $region49: #{rbf_layer_forward.1} parent=0
    _
  %s7 = ssub.s32 1, %s5
  %s8 = scalar_select 0, %s7, %s5
  $region1: #{rbf_layer_forward.1} parent=0
    #allocation2 [shape = 'u8[8192]{0}', space=vmem, size = 0x2000, scoped, tag = 'output window, operand 0']
    #allocation3 [shape = 's32[2]{0}', space=sflag, size = 0x8, scoped, tag = 'scoped memory for rbf_layer_forward.1']
    %9 = vsyncpa [#allocation3], 0
    %s10 = scalar_lea.sflag [#allocation3], 1
    %11 = vsyncpa %s10, 0
    loop: start=0, step=1, limit=4
    $region2: #{rbf_layer_forward.1} parent=1 // loop_pre_header
      _
    $region3: #{rbf_layer_forward.1} parent=1 // loop_header
      %s13 = sphi 0, %s17
      %p14 = scmp.ge.s32.totalorder %s13, 4
      %s23 = sphi 0, %s25
      %s26 = sphi 0, %s23
      %s27 = sphi 0, %s26
      %s43 = sphi 0, %s27
      %s47 = sphi 0, %s47
      %s49 = sphi 0, %s47
      %s50 = sphi 0, %s49
      %s64 = sphi 0, %s50
      %s68 = sphi 0, %s68
      %s70 = sphi 0, %s68
      %s71 = sphi 0, %s70
      %s85 = sphi 0, %s71
      %s89 = sphi 0, %s89
      %s91 = sphi 0, %s89
      %s92 = sphi 0, %s91
      %s106 = sphi 0, %s92
      %s112 = sphi 0, %s114
      %s115 = sphi 0, %s112
      %s116 = sphi 0, %s115
      %s132 = sphi 0, %s116
    $region4: #{rbf_layer_forward.1} parent=1 // loop_header_branch
      %16 = sbr.rel (%p14) target = $region8
    $region5: #{rbf_layer_forward.1} parent=1 // loop_body
      %s18 = ssub.s32 %s13, 1
      %s19 = ssub.s32 %s13, 2
      %s20 = sadd.s32 %s13, 1
      %s21 = ssub.s32 %s13, %s20
      %p22 = scmp.eq.s32.totalorder %s21, 0
      %s24 = sadd.s32 %s23, 1
      %s25 = scalar_select %p22, %s23, %s24
      %p28 = pneg %p22
      %p29 = scmp.eq.s32.totalorder %s13, 1
      %p30 = por %p28, %p29
      %p31 = scmp.ne.s32.totalorder %s23, %s26
      %p32 = scmp.eq.s32.totalorder %s13, 0
      %p33 = por %p31, %p32
      %p34 = scmp.ne.s32.totalorder %s23, %s26
      %p35 = scmp.eq.s32.totalorder %s18, 1
      %p36 = por %p34, %p35
      %p37 = scmp.ne.s32.totalorder %s26, %s27
      %p38 = scmp.eq.s32.totalorder %s18, 0
      %p39 = por %p37, %p38
      %p40 = scmp.ne.s32.totalorder %s26, %s27
      %p41 = scmp.eq.s32.totalorder %s19, 1
      %p42 = por %p40, %p41
      %p44 = scmp.ne.s32.totalorder %s27, %s43
      %p45 = scmp.eq.s32.totalorder %s19, 0
      %p46 = por %p44, %p45
      %s48 = sadd.s32 %s47, 1
      %p51 = scmp.eq.s32.totalorder %s13, 1
      %p52 = scmp.ne.s32.totalorder %s47, %s49
      %p53 = scmp.eq.s32.totalorder %s13, 0
      %p54 = por %p52, %p53
      %p55 = scmp.ne.s32.totalorder %s47, %s49
      %p56 = scmp.eq.s32.totalorder %s18, 1
      %p57 = por %p55, %p56
      %p58 = scmp.ne.s32.totalorder %s49, %s50
      %p59 = scmp.eq.s32.totalorder %s18, 0
      %p60 = por %p58, %p59
      %p61 = scmp.ne.s32.totalorder %s49, %s50
      %p62 = scmp.eq.s32.totalorder %s19, 1
      %p63 = por %p61, %p62
      %p65 = scmp.ne.s32.totalorder %s50, %s64
      %p66 = scmp.eq.s32.totalorder %s19, 0
      %p67 = por %p65, %p66
      %s69 = sadd.s32 %s68, 1
      %p72 = scmp.eq.s32.totalorder %s13, 1
      %p73 = scmp.ne.s32.totalorder %s68, %s70
      %p74 = scmp.eq.s32.totalorder %s13, 0
      %p75 = por %p73, %p74
      %p76 = scmp.ne.s32.totalorder %s68, %s70
      %p77 = scmp.eq.s32.totalorder %s18, 1
      %p78 = por %p76, %p77
      %p79 = scmp.ne.s32.totalorder %s70, %s71
      %p80 = scmp.eq.s32.totalorder %s18, 0
      %p81 = por %p79, %p80
      %p82 = scmp.ne.s32.totalorder %s70, %s71
      %p83 = scmp.eq.s32.totalorder %s19, 1
      %p84 = por %p82, %p83
      %p86 = scmp.ne.s32.totalorder %s71, %s85
      %p87 = scmp.eq.s32.totalorder %s19, 0
      %p88 = por %p86, %p87
      %s90 = sadd.s32 %s89, 1
      %p93 = scmp.eq.s32.totalorder %s13, 1
      %p94 = scmp.ne.s32.totalorder %s89, %s91
      %p95 = scmp.eq.s32.totalorder %s13, 0
      %p96 = por %p94, %p95
      %p97 = scmp.ne.s32.totalorder %s89, %s91
      %p98 = scmp.eq.s32.totalorder %s18, 1
      %p99 = por %p97, %p98
      %p100 = scmp.ne.s32.totalorder %s91, %s92
      %p101 = scmp.eq.s32.totalorder %s18, 0
      %p102 = por %p100, %p101
      %p103 = scmp.ne.s32.totalorder %s91, %s92
      %p104 = scmp.eq.s32.totalorder %s19, 1
      %p105 = por %p103, %p104
      %p107 = scmp.ne.s32.totalorder %s92, %s106
      %p108 = scmp.eq.s32.totalorder %s19, 0
      %p109 = por %p107, %p108
      %s110 = ssub.s32 %s13, %s20
      %p111 = scmp.eq.s32.totalorder %s110, 0
      %s113 = sadd.s32 %s112, 1
      %s114 = scalar_select %p111, %s112, %s113
      %p117 = pneg %p111
      %p118 = scmp.eq.s32.totalorder %s13, 1
      %p119 = por %p117, %p118
      %p120 = scmp.ne.s32.totalorder %s112, %s115
      %p121 = scmp.eq.s32.totalorder %s13, 0
      %p122 = por %p120, %p121
      %p123 = scmp.ne.s32.totalorder %s112, %s115
      %p124 = scmp.eq.s32.totalorder %s18, 1
      %p125 = por %p123, %p124
      %p126 = scmp.ne.s32.totalorder %s115, %s116
      %p127 = scmp.eq.s32.totalorder %s18, 0
      %p128 = por %p126, %p127
      %p129 = scmp.ne.s32.totalorder %s115, %s116
      %p130 = scmp.eq.s32.totalorder %s19, 1
      %p131 = por %p129, %p130
      %p133 = scmp.ne.s32.totalorder %s116, %s132
      %p134 = scmp.eq.s32.totalorder %s19, 0
      %p135 = por %p133, %p134
      %p136 = scmp.le.s32.totalorder 1, %s13
      %p137 = scmp.lt.s32.totalorder %s13, 3
      %p138 = pnand %p136, %p137
      %p139 = pneg %p138
      // Predicated region
      $region9: #{rbf_layer_forward.1} parent=5 // pred_check
        _
      $region10: #{rbf_layer_forward.1} parent=5 // pred_check_branch
        %141 = sbr.rel (%p138) target = $region12
      $region11: #{rbf_layer_forward.1} parent=5 // pred_region
        %s142 = ssub.s32 %s13, 1
        // Predicated region
        $region13: #{rbf_layer_forward.1} parent=11 // pred_check
          %p143 = pneg %p60
        $region14: #{rbf_layer_forward.1} parent=11 // pred_check_branch
          %145 = sbr.rel (%p143) target = $region16
        $region15: #{rbf_layer_forward.1} parent=11 // pred_region
          _
        $region16: #{rbf_layer_forward.1} parent=11 // pred_fallthru
          _
        // Predicated region
        $region17: #{rbf_layer_forward.1} parent=11 // pred_check
          %p146 = pneg %p81
        $region18: #{rbf_layer_forward.1} parent=11 // pred_check_branch
          %148 = sbr.rel (%p146) target = $region20
        $region19: #{rbf_layer_forward.1} parent=11 // pred_region
          _
        $region20: #{rbf_layer_forward.1} parent=11 // pred_fallthru
          _
        // Predicated region
        $region21: #{rbf_layer_forward.1} parent=11 // pred_check
          %p149 = pneg %p102
        $region22: #{rbf_layer_forward.1} parent=11 // pred_check_branch
          %151 = sbr.rel (%p149) target = $region24
        $region23: #{rbf_layer_forward.1} parent=11 // pred_region
          _
        $region24: #{rbf_layer_forward.1} parent=11 // pred_fallthru
          _
      $region12: #{rbf_layer_forward.1} parent=5 // pred_fallthru
        _
      %p152 = scmp.lt.s32.totalorder %s13, 2
      // Predicated region
      $region25: #{rbf_layer_forward.1} parent=5 // pred_check
        %p153 = pneg %p152
      $region26: #{rbf_layer_forward.1} parent=5 // pred_check_branch
        %155 = sbr.rel (%p153) target = $region28
      $region27: #{rbf_layer_forward.1} parent=5 // pred_region
        // Predicated region
        $region29: #{rbf_layer_forward.1} parent=27 // pred_check
          %p156 = pneg %p33
        $region30: #{rbf_layer_forward.1} parent=27 // pred_check_branch
          %158 = sbr.rel (%p156) target = $region32
        $region31: #{rbf_layer_forward.1} parent=27 // pred_region
          %p159 = scmp.lt.s32.totalorder %s13, 1
          %s160 = scalar_select %p159, %s13, 1
          %s161 = smul.addr %s160, 8
          %s162 = scalar_lea.vmem %s0, %s161
        $region32: #{rbf_layer_forward.1} parent=27 // pred_fallthru
          _
      $region28: #{rbf_layer_forward.1} parent=5 // pred_fallthru
        _
      %p163 = scmp.le.s32.totalorder 1, %s13
      %p164 = scmp.lt.s32.totalorder %s13, 3
      %p165 = pnand %p163, %p164
      %p166 = pneg %p165
      // Predicated region
      $region33: #{rbf_layer_forward.1} parent=5 // pred_check
        _
      $region34: #{rbf_layer_forward.1} parent=5 // pred_check_branch
        %168 = sbr.rel (%p165) target = $region36
      $region35: #{rbf_layer_forward.1} parent=5 // pred_region
        %s169 = ssub.s32 %s13, 1
        %p170 = scmp.lt.s32.totalorder %s18, 1
        %s171 = scalar_select %p170, %s18, 1
        %s172 = smul.addr %s171, 8
        %s173 = scalar_lea.vmem %s0, %s172
        %p174 = pneg %p39
        %p175 = pneg %p36
        %p176 = pneg %p60
        %p177 = pneg %p57
        %p178 = pneg %p81
        %p179 = pneg %p78
        %p180 = pneg %p102
        %p181 = pneg %p99
        %p182 = pneg %p128
        %p183 = pneg %p125
        %s184 = sand.u32 %s115, 1
        %s185 = scalar_lea.sflag [#allocation3], %s184
        %s186 = sand.u32 %s115, 1
        %s187 = smul.addr %s186, 8
        %s188 = scalar_lea.vmem [#allocation2], %s187
        %p189 = scmp.lt.s32.totalorder %s18, 1
        %s190 = scalar_select %p189, %s18, 1
        %s191 = smul.addr %s190, 8
        %s192 = scalar_lea.vmem %s0, %s191
        %v194 = vld [vmem:[%s192] sm:$0xff]
        %v195 = vpack.c.bf16 %v194, %v194
        %v196 = vunpack.c.l.bf16 %v195
        %v197 = vsub.f32 %v194, %v196
        %v198 = vpack.c.bf16 %v197, %v197
        %v199 = vld [vmem:[%s1] sm:$0xf]
        %v200 = vld [vmem:[%s1 + $0x4] sm:$0xf]
        %v201 = vld [vmem:[%s1 + $0x8] sm:$0xf]
        %v202 = vld [vmem:[%s1 + $0xc] sm:$0xf]
        %v207 = vunpack.c.l.b16 %v199
        %v208 = vunpack.c.l.b16 %v200
        %v209 = vunpack.c.l.b16 %v201
        %v210 = vunpack.c.l.b16 %v202
        %v211 = vpack.c.b16 %v208, %v207
        %v212 = vpack.c.b16 %v210, %v209
        %vm215 = vcmask 261120
        %v217 = vsel %vm215, %v198, 0
        %219 = vmatprep.subr.bf16.mxu0 0
        %220 = vmatpush1.bf16.msra.mxu0 0
        %221 = vmatprep.subr.bf16.mxu0 0
        %222 = vmatpush1.bf16.msra.mxu0 0
        %223 = vmatprep.subr.bf16.mxu0 0
        %224 = vmatpush1.bf16.msra.mxu0 0
        %225 = vmatprep.subr.bf16.mxu0 0
        %226 = vmatpush1.bf16.msra.mxu0 0
        %227 = vmatprep.subr.bf16.mxu0 0
        %228 = vmatpush1.bf16.msra.mxu0 0
        %229 = vmatprep.subr.bf16.mxu0 0
        %230 = vmatpush1.bf16.msra.mxu0 0
        %231 = vmatprep.subr.bf16.mxu0 0
        %232 = vmatpush1.bf16.msra.mxu0 %v212
        %233 = vmatprep.subr.bf16.mxu0 0
        %234 = vmatpush1.bf16.msra.mxu0 %v211
        %235 = vmatprep.subr.bf16.mxu0 0
        %236 = vmatpush2.bf16.msra.mxu0 0
        %237 = vmatprep.subr.bf16.mxu0 0
        %238 = vmatpush2.bf16.msra.mxu0 0
        %239 = vmatprep.subr.bf16.mxu0 0
        %240 = vmatpush2.bf16.msra.mxu0 0
        %241 = vmatprep.subr.bf16.mxu0 0
        %242 = vmatpush2.bf16.msra.mxu0 0
        %243 = vmatprep.subr.bf16.mxu0 0
        %244 = vmatpush2.bf16.msra.mxu0 0
        %245 = vmatprep.subr.bf16.mxu0 0
        %246 = vmatpush2.bf16.msra.mxu0 0
        %247 = vmatprep.subr.bf16.mxu0 0
        %248 = vmatpush2.bf16.msra.mxu0 0
        %249 = vmatprep.subr.bf16.mxu0 0
        %250 = vmatpush2.bf16.msra.mxu0 0
        %251 = vmatprep.mubr.bf16.mxu0 0
        %252 = vmatmul.mubr.bf16.gmra.mxu0 %v217
        %v253 = vpop.f32.mrf.mxu0
        %v254 = vadd.f32 0.0, %v253
        %v255 = vpop.f32.mrf.mxu0
        %v256 = vpop.f32.mrf.mxu0
        %v257 = vpop.f32.mrf.mxu0
        %258 = vdwg.mxu0
        %v260 = vsel %vm215, %v195, 0
        %262 = vmatprep.subr.bf16.mxu0 0
        %263 = vmatpush1.bf16.msra.mxu0 0
        %264 = vmatprep.subr.bf16.mxu0 0
        %265 = vmatpush1.bf16.msra.mxu0 0
        %266 = vmatprep.subr.bf16.mxu0 0
        %267 = vmatpush1.bf16.msra.mxu0 0
        %268 = vmatprep.subr.bf16.mxu0 0
        %269 = vmatpush1.bf16.msra.mxu0 0
        %270 = vmatprep.subr.bf16.mxu0 0
        %271 = vmatpush1.bf16.msra.mxu0 0
        %272 = vmatprep.subr.bf16.mxu0 0
        %273 = vmatpush1.bf16.msra.mxu0 0
        %274 = vmatprep.subr.bf16.mxu0 0
        %275 = vmatpush1.bf16.msra.mxu0 %v212
        %276 = vmatprep.subr.bf16.mxu0 0
        %277 = vmatpush1.bf16.msra.mxu0 %v211
        %278 = vmatprep.subr.bf16.mxu0 0
        %279 = vmatpush2.bf16.msra.mxu0 0
        %280 = vmatprep.subr.bf16.mxu0 0
        %281 = vmatpush2.bf16.msra.mxu0 0
        %282 = vmatprep.subr.bf16.mxu0 0
        %283 = vmatpush2.bf16.msra.mxu0 0
        %284 = vmatprep.subr.bf16.mxu0 0
        %285 = vmatpush2.bf16.msra.mxu0 0
        %286 = vmatprep.subr.bf16.mxu0 0
        %287 = vmatpush2.bf16.msra.mxu0 0
        %288 = vmatprep.subr.bf16.mxu0 0
        %289 = vmatpush2.bf16.msra.mxu0 0
        %290 = vmatprep.subr.bf16.mxu0 0
        %291 = vmatpush2.bf16.msra.mxu0 0
        %292 = vmatprep.subr.bf16.mxu0 0
        %293 = vmatpush2.bf16.msra.mxu0 0
        %294 = vmatprep.mubr.bf16.mxu0 0
        %295 = vmatmul.mubr.bf16.gmra.mxu0 %v260
        %v296 = vpop.f32.mrf.mxu0
        %v297 = vadd.f32 %v254, %v296
        %v298 = vpop.f32.mrf.mxu0
        %v299 = vpop.f32.mrf.mxu0
        %v300 = vpop.f32.mrf.mxu0
        %301 = vdwg.mxu0
        %v302 = vmul.f32 %v194, %v194
        %v303 = vsel %vm215, %v302, 0.0
        %304 = vadd.xlane.f32.xlu0 %v303
        %v305 = vpop.xlane.xlu0 %304
        %v306 = vld [vmem:[%s2] sm:$0x1]
        %v307 = vld [vmem:[%s2 + $0x1] sm:$0x1]
        %v308 = vsub.f32 %v305, %v297
        %v309 = vlaneseq
        %v310 = vshrl.u32 %v309, 7
        %v311 = vsub.s32 0, %v310
        %v312 = vrot.slane %v306, %v311
        %v313 = vmul.f32 %v312, %v308
        %v314 = vlaneseq
        %v315 = vshrl.u32 %v314, 7
        %v316 = vsub.s32 0, %v315
        %v317 = vrot.slane %v307, %v316
        %v318 = vadd.f32 %v313, %v317
        %v319 = vmin.f32 %v318, 0.0
        %v320 = vmul.f32 %v319, 1.442695
        %v321 = vpow.pop %v320
        %322 = vadd.xlane.f32.xlu0 %v321
        %v323 = vpop.xlane.xlu0 %322
        %v324 = vpack.c.bf16 %v321, %v321
        %v325 = vld [vmem:[%s3] sm:$0xf]
        %v326 = vld [vmem:[%s3 + $0x4] sm:$0xf]
        %v327 = vld [vmem:[%s3 + $0x8] sm:$0xf]
        %v328 = vld [vmem:[%s3 + $0xc] sm:$0xf]
        %v329 = vld [vmem:[%s3 + $0x10] sm:$0xf]
        %v330 = vld [vmem:[%s3 + $0x14] sm:$0xf]
        %v331 = vld [vmem:[%s3 + $0x18] sm:$0xf]
        %v332 = vld [vmem:[%s3 + $0x1c] sm:$0xf]
        %v333 = vld [vmem:[%s3 + $0x20] sm:$0xf]
        %v334 = vld [vmem:[%s3 + $0x24] sm:$0xf]
        %v335 = vld [vmem:[%s3 + $0x28] sm:$0xf]
        %v336 = vld [vmem:[%s3 + $0x2c] sm:$0xf]
        %v337 = vld [vmem:[%s3 + $0x30] sm:$0xf]
        %v338 = vld [vmem:[%s3 + $0x34] sm:$0xf]
        %v339 = vld [vmem:[%s3 + $0x38] sm:$0xf]
        %v340 = vld [vmem:[%s3 + $0x3c] sm:$0xf]
        %v357 = vunpack.c.l.b16 %v325
        %v358 = vunpack.c.l.b16 %v326
        %v359 = vunpack.c.l.b16 %v327
        %v360 = vunpack.c.l.b16 %v328
        %v361 = vunpack.c.l.b16 %v329
        %v362 = vunpack.c.l.b16 %v330
        %v363 = vunpack.c.l.b16 %v331
        %v364 = vunpack.c.l.b16 %v332
        %v365 = vunpack.c.l.b16 %v333
        %v366 = vunpack.c.l.b16 %v334
        %v367 = vunpack.c.l.b16 %v335
        %v368 = vunpack.c.l.b16 %v336
        %v369 = vunpack.c.l.b16 %v337
        %v370 = vunpack.c.l.b16 %v338
        %v371 = vunpack.c.l.b16 %v339
        %v372 = vunpack.c.l.b16 %v340
        %v373 = vpack.c.b16 %v358, %v357
        %v374 = vpack.c.b16 %v360, %v359
        %v375 = vpack.c.b16 %v362, %v361
        %v376 = vpack.c.b16 %v364, %v363
        %v377 = vpack.c.b16 %v366, %v365
        %v378 = vpack.c.b16 %v368, %v367
        %v379 = vpack.c.b16 %v370, %v369
        %v380 = vpack.c.b16 %v372, %v371
        %389 = vmatprep.subr.bf16.mxu0 0
        %390 = vmatpush1.bf16.msra.mxu0 %v380
        %391 = vmatprep.subr.bf16.mxu0 0
        %392 = vmatpush1.bf16.msra.mxu0 %v379
        %393 = vmatprep.subr.bf16.mxu0 0
        %394 = vmatpush1.bf16.msra.mxu0 %v378
        %395 = vmatprep.subr.bf16.mxu0 0
        %396 = vmatpush1.bf16.msra.mxu0 %v377
        %397 = vmatprep.subr.bf16.mxu0 0
        %398 = vmatpush1.bf16.msra.mxu0 %v376
        %399 = vmatprep.subr.bf16.mxu0 0
        %400 = vmatpush1.bf16.msra.mxu0 %v375
        %401 = vmatprep.subr.bf16.mxu0 0
        %402 = vmatpush1.bf16.msra.mxu0 %v374
        %403 = vmatprep.subr.bf16.mxu0 0
        %404 = vmatpush1.bf16.msra.mxu0 %v373
        %405 = vmatprep.subr.bf16.mxu0 0
        %406 = vmatpush2.bf16.msra.mxu0 0
        %407 = vmatprep.subr.bf16.mxu0 0
        %408 = vmatpush2.bf16.msra.mxu0 0
        %409 = vmatprep.subr.bf16.mxu0 0
        %410 = vmatpush2.bf16.msra.mxu0 0
        %411 = vmatprep.subr.bf16.mxu0 0
        %412 = vmatpush2.bf16.msra.mxu0 0
        %413 = vmatprep.subr.bf16.mxu0 0
        %414 = vmatpush2.bf16.msra.mxu0 0
        %415 = vmatprep.subr.bf16.mxu0 0
        %416 = vmatpush2.bf16.msra.mxu0 0
        %417 = vmatprep.subr.bf16.mxu0 0
        %418 = vmatpush2.bf16.msra.mxu0 0
        %419 = vmatprep.subr.bf16.mxu0 0
        %420 = vmatpush2.bf16.msra.mxu0 0
        %421 = vmatprep.mubr.bf16.mxu0 0
        %422 = vmatmul.mubr.bf16.gmra.mxu0 %v324
        %v423 = vpop.f32.mrf.mxu0
        %v424 = vadd.f32 0.0, %v423
        %v425 = vpop.f32.mrf.mxu0
        %v426 = vpop.f32.mrf.mxu0
        %v427 = vpop.f32.mrf.mxu0
        %428 = vdwg.mxu0
        %v429 = vadd.f32 %v323, 1e-09
        %v430 = vrcp.pop %v429
        %v431 = vmul.f32 %v424, %v430
        %vm432 = vcmask 130048
        %433 = vst.msk [vmem:[%s188] sm:$0xff] %vm432, %v431
        %s434 = sand.u32 %s115, 1
        %s435 = scalar_lea.sflag [#allocation3], %s434
        %s436 = sand.u32 %s115, 1
        %s437 = smul.addr %s436, 8
        %s438 = scalar_lea.vmem [#allocation2], %s437
        // Predicated region
        $region37: #{rbf_layer_forward.1} parent=35 // pred_check
          %p439 = pneg %p125
        $region38: #{rbf_layer_forward.1} parent=35 // pred_check_branch
          %441 = sbr.rel (%p439) target = $region40
        $region39: #{rbf_layer_forward.1} parent=35 // pred_region
          %s443 = ssub.s32 128, 128
          %444 = vsyncadd %s435, %s443
          %s445 = smul.addr %s18, 128
          %s446 = scalar_lea.hbm %s4, %s445
          %s448 = sshll.u32 %s438, 4
          %s449 = int_to_ptr.vmem [resolvable:$true] %s448
          %451 = dma.vmem_to_hbm [thread:$0]  %s449, 128, %s446, %s435
        $region40: #{rbf_layer_forward.1} parent=35 // pred_fallthru
          _
      $region36: #{rbf_layer_forward.1} parent=5 // pred_fallthru
        _
      %p452 = scmp.le.s32.totalorder 2, %s13
      // Predicated region
      $region41: #{rbf_layer_forward.1} parent=5 // pred_check
        %p453 = pneg %p452
      $region42: #{rbf_layer_forward.1} parent=5 // pred_check_branch
        %455 = sbr.rel (%p453) target = $region44
      $region43: #{rbf_layer_forward.1} parent=5 // pred_region
        %s456 = ssub.s32 %s13, 2
        // Predicated region
        $region45: #{rbf_layer_forward.1} parent=43 // pred_check
          %p457 = pneg %p131
        $region46: #{rbf_layer_forward.1} parent=43 // pred_check_branch
          %459 = sbr.rel (%p457) target = $region48
        $region47: #{rbf_layer_forward.1} parent=43 // pred_region
          %s460 = sand.u32 %s116, 1
          %s461 = scalar_lea.sflag [#allocation3], %s460
          %s462 = sand.u32 %s116, 1
          %s463 = smul.addr %s462, 8
          %s464 = scalar_lea.vmem [#allocation2], %s463
          %465 = dma.done %s461, 128
        $region48: #{rbf_layer_forward.1} parent=43 // pred_fallthru
          _
      $region44: #{rbf_layer_forward.1} parent=5 // pred_fallthru
        _
    $region6: #{rbf_layer_forward.1} parent=1 // loop_footer
      %s17 = sadd.s32 1, %s13
    $region7: #{rbf_layer_forward.1} parent=1 // loop_footer_branch
      %12 = sbr.rel target = $region3
    $region8: #{rbf_layer_forward.1} parent=1 // loop_exit
      _
    %466 = vsyncpa [#allocation3], 1
    %s467 = scalar_lea.sflag [#allocation3], 1
    %468 = vsyncpa %s467, 1

</llo_original>
